<compile_context>
chip_gen: v7x
topology: tpu7x:2x2x1
jax: 0.10.0
libtpu: 0.0.40
codegen_flags: <defaults>
</compile_context>

<pallas_src>
from functools import partial

import jax
import jax.numpy as jnp
import numpy as np
from jax import lax
from jax.experimental import pallas as pl
from jax.experimental.pallas import tpu as pltpu


def basic_block_kernel(x_ref, t1_ref, t2_ref, bias_ref, o_ref, *, dilation):
    """One grid step = B packed super-images, lane-packed (rows, P*W*C) form.

    x_ref   : (B, H, L)        bf16  packed input (L = P*W*Cin = 128, lane-dense)
    t1_ref  : (3*L, L)         bf16  conv1 K-stacked block-diag Toeplitz weights
                                      (BN1 scale folded into columns)
    t2_ref  : (3*L, L)         bf16  conv2 weights (dilation 1, BN2 scale folded)
    bias_ref: (2, L)           f32   row 0 = bn1 bias, row 1 = bn2 bias (tiled)
    o_ref   : (B, H, L)        out_dtype  lane-dense output
    """
    d = dilation
    B, H, L_in = x_ref.shape
    L_out = o_ref.shape[2]

    bias = bias_ref[...]                       # (2, L) f32, loaded once
    b1 = bias[0:1, :]
    b2 = bias[1:2, :]
    t1 = t1_ref[...]                           # (3*L, L) bf16, loaded once
    t2 = t2_ref[...]

    zin = jnp.zeros((d, L_in), jnp.bfloat16)   # conv1 vertical halo rows
    zmid = jnp.zeros((1, L_out), jnp.bfloat16)  # conv2 vertical halo rows

    for g in range(B):                         # static unroll, B is small
        xin = x_ref[g]                         # (H, L) bf16

        # conv1: build the row-padded input in vregs (bf16, no scratch), fuse
        # the 3 kh taps along K and run ONE MXU matmul with f32 accumulation.
        xpad = jnp.concatenate([zin, xin, zin], axis=0)            # (H+2d, L)
        x_taps = jnp.concatenate(
            [xpad[kh * d:kh * d + H, :] for kh in range(3)], axis=1)  # (H, 3L)
        acc1 = jnp.dot(x_taps, t1, preferred_element_type=jnp.float32)

        # bn1 (scale folded into t1) + relu, cast once to bf16 for conv2.
        out1 = jnp.maximum(acc1 + b1, 0.0).astype(jnp.bfloat16)     # (H, L)

        # conv2 (dilation is always 1 in BasicBlock), same fused-tap matmul.
        mpad = jnp.concatenate([zmid, out1, zmid], axis=0)          # (H+2, L)
        m_taps = jnp.concatenate(
            [mpad[kh:kh + H, :] for kh in range(3)], axis=1)        # (H, 3L)
        acc2 = jnp.dot(m_taps, t2, preferred_element_type=jnp.float32)

        # bn2 bias + residual (reuse already-loaded input, no 2nd HBM stream)
        # + relu; store lane-dense (bf16 by default).
        out = jnp.maximum(acc2 + b2 + xin.astype(jnp.float32), 0.0)
        o_ref[g] = out.astype(o_ref.dtype)


def pack_conv3x3_weights(w_hwio, width, pack, dilation=1, scale=None,
                         dtype=jnp.bfloat16):
    """Fold kw taps + horizontal zero padding of a 3x3 conv (stride 1,
    padding=dilation) into block-Toeplitz matrices, replicated block-diagonally
    for `pack` lane-packed images, with the BN scale (optional) folded into the
    output columns in f32 before the bf16 cast.

        conv(x)[h, :] = sum_kh  xrow_padded[h + kh*dilation, :] @ T[kh]

    Rows packed as (p, w, c) -> (p*W + w)*C + c.  Returns T stacked along K:
    shape (3 * pack*W*Cin, pack*W*Cout)."""
    w = np.asarray(w_hwio).astype(np.float32)              # (3, 3, Cin, Cout)
    if scale is not None:
        w = w * np.asarray(scale).astype(np.float32)[None, None, None, :]
    cin, cout = w.shape[2], w.shape[3]
    lin, lout = pack * width * cin, pack * width * cout
    t = np.zeros((3, lin, lout), np.float32)
    for p in range(pack):                                  # block-diagonal
        ro, co = p * width * cin, p * width * cout
        for kh in range(3):
            for wo in range(width):
                for kw in range(3):
                    j = wo + dilation * (kw - 1)
                    if 0 <= j < width:
                        t[kh, ro + j * cin:ro + (j + 1) * cin,
                          co + wo * cout:co + (wo + 1) * cout] = w[kh, kw]
    return jnp.asarray(t.reshape(3 * lin, lout), dtype=dtype)


def basic_block_pallas(x_nhwc, w1, s1, b1, w2, s2, b2, *, atrous=1,
                       out_dtype=jnp.bfloat16, lane_pack=None,
                       imgs_per_step=None):
    """x_nhwc: (N,H,W,C); w*: (3,3,C,C) HWIO; s*/b*: (C,) folded BN params."""
    N, H, W, Cin = x_nhwc.shape
    Cout = w1.shape[-1]
    assert Cin == Cout, "identity residual needs inplanes == planes (no downsample)"

    # Lane packing: pack P images along lanes so the packed width hits the
    # 128-lane vreg width (fills v5e's 128x128 MXU tile, doubles fill on
    # v6e/v7x's 256-wide MXU, and makes every vld/vst/VPU op lane-dense).
    P = lane_pack if lane_pack is not None else max(1, 128 // (W * Cin))
    assert N % P == 0, "batch must be divisible by the lane packing factor"
    G = N // P                               # number of packed super-images
    B = imgs_per_step if imgs_per_step is not None else (2 if G % 2 == 0 else 1)
    assert G % B == 0
    L_in, L_out = P * W * Cin, P * W * Cout

    # Packed bf16 input: (G, H, P*W*Cin), lane index = p*W*C + w*C + c.
    x_packed = (x_nhwc.astype(jnp.bfloat16)
                .reshape(G, P, H, W * Cin)
                .transpose(0, 2, 1, 3)
                .reshape(G, H, L_in))

    # K-stacked block-diag Toeplitz weights with BN scale folded in (f32 fold,
    # then bf16 cast).
    t1 = pack_conv3x3_weights(w1, W, P, dilation=atrous, scale=s1)
    t2 = pack_conv3x3_weights(w2, W, P, dilation=1, scale=s2)

    def tile_bias(b):  # per-channel -> packed (p, w, c) lane vector
        return jnp.tile(jnp.asarray(b, jnp.float32).reshape(-1), P * W)

    bias = jnp.stack([tile_bias(b1), tile_bias(b2)], axis=0)   # (2, L_out) f32

    grid_spec = pltpu.PrefetchScalarGridSpec(
        num_scalar_prefetch=0,
        grid=(G // B,),
        in_specs=[
            pl.BlockSpec((B, H, L_in), lambda n: (n, 0, 0)),        # x (packed)
            pl.BlockSpec((3 * L_in, L_out), lambda n: (0, 0)),      # T1 (const)
            pl.BlockSpec((3 * L_out, L_out), lambda n: (0, 0)),     # T2 (const)
            pl.BlockSpec((2, L_out), lambda n: (0, 0)),             # biases
        ],
        out_specs=pl.BlockSpec((B, H, L_out), lambda n: (n, 0, 0)),
    )

    out_packed = pl.pallas_call(
        partial(basic_block_kernel, dilation=atrous),
        out_shape=jax.ShapeDtypeStruct((G, H, L_out), out_dtype),
        grid_spec=grid_spec,
        compiler_params=pltpu.CompilerParams(
            dimension_semantics=("parallel",),   # independent steps (2 TCs on v7x)
            vmem_limit_bytes=32 * 1024 * 1024,
        ),
    )(x_packed, t1, t2, bias)

    return (out_packed.reshape(G, H, P, W * Cout)
            .transpose(0, 2, 1, 3)
            .reshape(N, H, W, Cout))


def basic_block_ref(x_nhwc, w1, s1, b1, w2, s2, b2, *, atrous=1):
    """Pure-JAX reference with matched numerics (BN scale folded into bf16
    weights in f32, bf16 operands, f32 accumulation)."""
    dn = ("NHWC", "HWIO", "NHWC")
    w1s = (jnp.asarray(w1, jnp.float32) * s1).astype(jnp.bfloat16)
    w2s = (jnp.asarray(w2, jnp.float32) * s2).astype(jnp.bfloat16)
    y = lax.conv_general_dilated(
        x_nhwc.astype(jnp.bfloat16), w1s, window_strides=(1, 1),
        padding=((atrous, atrous), (atrous, atrous)),
        rhs_dilation=(atrous, atrous), dimension_numbers=dn,
        preferred_element_type=jnp.float32)
    y = jnp.maximum(y + b1, 0.0).astype(jnp.bfloat16)
    y = lax.conv_general_dilated(
        y, w2s, window_strides=(1, 1), padding=((1, 1), (1, 1)),
        dimension_numbers=dn, preferred_element_type=jnp.float32)
    return jnp.maximum(y + b2 + x_nhwc.astype(jnp.float32), 0.0)


def fold_bn(gamma, beta, running_mean, running_var, eps=1e-5):
    scale = gamma / jnp.sqrt(running_var + eps)
    bias = beta - running_mean * scale
    return scale, bias


if __name__ == "__main__":
    key = jax.random.PRNGKey(0)
    N, C, H, W = 8, 4, 16, 16            # inplanes = planes = 4, stride = 1
    ks = jax.random.split(key, 11)

    # PyTorch-convention NCHW input, moved to NHWC (channels -> lanes), bf16.
    x_nchw = jax.random.normal(ks[0], (N, C, H, W), jnp.float32)
    x_nhwc = jnp.transpose(x_nchw, (0, 2, 3, 1)).astype(jnp.bfloat16)

    # conv weights, HWIO, bf16 (MXU dtype)
    w1 = (0.2 * jax.random.normal(ks[1], (3, 3, C, C), jnp.float32)).astype(jnp.bfloat16)
    w2 = (0.2 * jax.random.normal(ks[2], (3, 3, C, C), jnp.float32)).astype(jnp.bfloat16)

    # BatchNorm parameters (inference form), folded to per-channel scale/bias
    g1 = 1.0 + 0.1 * jax.random.normal(ks[3], (C,), jnp.float32)
    be1 = 0.1 * jax.random.normal(ks[4], (C,), jnp.float32)
    m1 = 0.1 * jax.random.normal(ks[5], (C,), jnp.float32)
    v1 = jnp.abs(jax.random.normal(ks[6], (C,), jnp.float32)) + 0.5
    g2 = 1.0 + 0.1 * jax.random.normal(ks[7], (C,), jnp.float32)
    be2 = 0.1 * jax.random.normal(ks[8], (C,), jnp.float32)
    m2 = 0.1 * jax.random.normal(ks[9], (C,), jnp.float32)
    v2 = jnp.abs(jax.random.normal(ks[10], (C,), jnp.float32)) + 0.5
    s1, b1 = fold_bn(g1, be1, m1, v1)
    s2, b2 = fold_bn(g2, be2, m2, v2)

    # f32-output validation path (tight tolerance), default block and atrous=2.
    for atrous in (1, 2):
        out = jax.block_until_ready(
            basic_block_pallas(x_nhwc, w1, s1, b1, w2, s2, b2, atrous=atrous,
                               out_dtype=jnp.float32))
        ref = jax.block_until_ready(
            basic_block_ref(x_nhwc, w1, s1, b1, w2, s2, b2, atrous=atrous))
        np.testing.assert_allclose(np.asarray(out), np.asarray(ref),
                                   rtol=5e-3, atol=5e-3)

    # Default bf16-output path (halved HBM writeback); tolerance covers the
    # final bf16 rounding only.
    out_bf16 = jax.block_until_ready(
        basic_block_pallas(x_nhwc, w1, s1, b1, w2, s2, b2, atrous=1))
    ref = jax.block_until_ready(
        basic_block_ref(x_nhwc, w1, s1, b1, w2, s2, b2, atrous=1))
    np.testing.assert_allclose(np.asarray(out_bf16).astype(np.float32),
                               np.asarray(ref), rtol=2e-2, atol=2e-2)

    print("KERNEL_OK")
</pallas_src>

<mosaic_0001>
module attributes {stable_mosaic.version = 11 : i64} {
  func.func @basic_block_kernel(%arg0: i32, %arg1: memref<2x16x128xbf16, #tpu.memory_space<vmem>>, %arg2: memref<384x128xbf16, #tpu.memory_space<vmem>>, %arg3: memref<384x128xbf16, #tpu.memory_space<vmem>>, %arg4: memref<2x128xf32, #tpu.memory_space<vmem>>, %arg5: memref<2x16x128xf32, #tpu.memory_space<vmem>>) attributes {dimension_semantics = [#tpu.dimension_semantics<parallel>], iteration_bounds = array<i64: 2>, scalar_prefetch = 0 : i64, scratch_operands = 0 : i64, tpu.core_type = #tpu.core_type<tc>, window_params = [{transform_indices = @transform_0, window_bounds = array<i64: 2, 16, 128>}, {pipeline_mode = #tpu.pipeline_mode<synchronous>, transform_indices = @transform_1, window_bounds = array<i64: 384, 128>}, {pipeline_mode = #tpu.pipeline_mode<synchronous>, transform_indices = @transform_2, window_bounds = array<i64: 384, 128>}, {pipeline_mode = #tpu.pipeline_mode<synchronous>, transform_indices = @transform_3, window_bounds = array<i64: 2, 128>}, {transform_indices = @transform_4, window_bounds = array<i64: 2, 16, 128>}]} {
    %c0 = arith.constant 0 : index
    %c0_0 = arith.constant 0 : index
    %0 = vector.load %arg4[%c0, %c0_0] : memref<2x128xf32, #tpu.memory_space<vmem>>, vector<2x128xf32>
    %1 = vector.extract_strided_slice %0 {offsets = [0, 0], sizes = [1, 128], strides = [1, 1]} : vector<2x128xf32> to vector<1x128xf32>
    %2 = vector.extract_strided_slice %0 {offsets = [1, 0], sizes = [1, 128], strides = [1, 1]} : vector<2x128xf32> to vector<1x128xf32>
    %c0_1 = arith.constant 0 : index
    %c0_2 = arith.constant 0 : index
    %3 = vector.load %arg2[%c0_1, %c0_2] : memref<384x128xbf16, #tpu.memory_space<vmem>>, vector<384x128xbf16>
    %c0_3 = arith.constant 0 : index
    %c0_4 = arith.constant 0 : index
    %4 = vector.load %arg3[%c0_3, %c0_4] : memref<384x128xbf16, #tpu.memory_space<vmem>>, vector<384x128xbf16>
    %cst = arith.constant 0.000000e+00 : bf16
    %5 = vector.broadcast %cst : bf16 to vector<1x128xbf16>
    %cst_5 = arith.constant 0.000000e+00 : bf16
    %6 = vector.broadcast %cst_5 : bf16 to vector<1x128xbf16>
    %c0_6 = arith.constant 0 : index
    %c0_7 = arith.constant 0 : index
    %c0_8 = arith.constant 0 : index
    %7 = vector.load %arg1[%c0_6, %c0_7, %c0_8] : memref<2x16x128xbf16, #tpu.memory_space<vmem>>, vector<1x16x128xbf16>
    %8 = vector.shape_cast %7 : vector<1x16x128xbf16> to vector<16x128xbf16>
    %9 = tpu.concatenate %5, %8, %5 in 0 : vector<1x128xbf16>, vector<16x128xbf16>, vector<1x128xbf16> -> vector<18x128xbf16>
    %10 = vector.extract_strided_slice %9 {offsets = [0, 0], sizes = [16, 128], strides = [1, 1]} : vector<18x128xbf16> to vector<16x128xbf16>
    %11 = vector.extract_strided_slice %9 {offsets = [1, 0], sizes = [16, 128], strides = [1, 1]} : vector<18x128xbf16> to vector<16x128xbf16>
    %12 = vector.extract_strided_slice %9 {offsets = [2, 0], sizes = [16, 128], strides = [1, 1]} : vector<18x128xbf16> to vector<16x128xbf16>
    %13 = tpu.concatenate %10, %11, %12 in 1 : vector<16x128xbf16>, vector<16x128xbf16>, vector<16x128xbf16> -> vector<16x384xbf16>
    %cst_9 = arith.constant dense<0.000000e+00> : vector<16x128xf32>
    %14 = tpu.matmul %13, %3, %cst_9 {dimension_numbers = #tpu.dot_dimension_numbers<[1], [0], [0], [1], [0, 0, 1, 1], [], []>} : vector<16x384xbf16>, vector<384x128xbf16>, vector<16x128xf32> -> vector<16x128xf32>
    %15 = vector.broadcast %1 : vector<1x128xf32> to vector<16x128xf32>
    %16 = arith.addf %14, %15 : vector<16x128xf32>
    %cst_10 = arith.constant 0.000000e+00 : f32
    %17 = vector.broadcast %cst_10 : f32 to vector<16x128xf32>
    %18 = arith.maximumf %16, %17 : vector<16x128xf32>
    %19 = arith.truncf %18 : vector<16x128xf32> to vector<16x128xbf16>
    %20 = tpu.concatenate %6, %19, %6 in 0 : vector<1x128xbf16>, vector<16x128xbf16>, vector<1x128xbf16> -> vector<18x128xbf16>
    %21 = vector.extract_strided_slice %20 {offsets = [0, 0], sizes = [16, 128], strides = [1, 1]} : vector<18x128xbf16> to vector<16x128xbf16>
    %22 = vector.extract_strided_slice %20 {offsets = [1, 0], sizes = [16, 128], strides = [1, 1]} : vector<18x128xbf16> to vector<16x128xbf16>
    %23 = vector.extract_strided_slice %20 {offsets = [2, 0], sizes = [16, 128], strides = [1, 1]} : vector<18x128xbf16> to vector<16x128xbf16>
    %24 = tpu.concatenate %21, %22, %23 in 1 : vector<16x128xbf16>, vector<16x128xbf16>, vector<16x128xbf16> -> vector<16x384xbf16>
    %cst_11 = arith.constant dense<0.000000e+00> : vector<16x128xf32>
    %25 = tpu.matmul %24, %4, %cst_11 {dimension_numbers = #tpu.dot_dimension_numbers<[1], [0], [0], [1], [0, 0, 1, 1], [], []>} : vector<16x384xbf16>, vector<384x128xbf16>, vector<16x128xf32> -> vector<16x128xf32>
    %26 = vector.broadcast %2 : vector<1x128xf32> to vector<16x128xf32>
    %27 = arith.addf %25, %26 : vector<16x128xf32>
    %28 = arith.extf %8 : vector<16x128xbf16> to vector<16x128xf32>
    %29 = arith.addf %27, %28 : vector<16x128xf32>
    %cst_12 = arith.constant 0.000000e+00 : f32
    %30 = vector.broadcast %cst_12 : f32 to vector<16x128xf32>
    %31 = arith.maximumf %29, %30 : vector<16x128xf32>
    %c0_13 = arith.constant 0 : index
    %c0_14 = arith.constant 0 : index
    %c0_15 = arith.constant 0 : index
    %32 = vector.load %arg5[%c0_13, %c0_14, %c0_15] : memref<2x16x128xf32, #tpu.memory_space<vmem>>, vector<1x16x128xf32>
    %33 = vector.shape_cast %32 : vector<1x16x128xf32> to vector<16x128xf32>
    %34 = vector.shape_cast %31 : vector<16x128xf32> to vector<1x16x128xf32>
    tpu.vector_store %arg5[%c0_13, %c0_14, %c0_15], %34 {strides = array<i32>} : memref<2x16x128xf32, #tpu.memory_space<vmem>>, vector<1x16x128xf32>,
    %c1 = arith.constant 1 : index
    %c0_16 = arith.constant 0 : index
    %c0_17 = arith.constant 0 : index
    %35 = vector.load %arg1[%c1, %c0_16, %c0_17] : memref<2x16x128xbf16, #tpu.memory_space<vmem>>, vector<1x16x128xbf16>
    %36 = vector.shape_cast %35 : vector<1x16x128xbf16> to vector<16x128xbf16>
    %37 = tpu.concatenate %5, %36, %5 in 0 : vector<1x128xbf16>, vector<16x128xbf16>, vector<1x128xbf16> -> vector<18x128xbf16>
    %38 = vector.extract_strided_slice %37 {offsets = [0, 0], sizes = [16, 128], strides = [1, 1]} : vector<18x128xbf16> to vector<16x128xbf16>
    %39 = vector.extract_strided_slice %37 {offsets = [1, 0], sizes = [16, 128], strides = [1, 1]} : vector<18x128xbf16> to vector<16x128xbf16>
    %40 = vector.extract_strided_slice %37 {offsets = [2, 0], sizes = [16, 128], strides = [1, 1]} : vector<18x128xbf16> to vector<16x128xbf16>
    %41 = tpu.concatenate %38, %39, %40 in 1 : vector<16x128xbf16>, vector<16x128xbf16>, vector<16x128xbf16> -> vector<16x384xbf16>
    %cst_18 = arith.constant dense<0.000000e+00> : vector<16x128xf32>
    %42 = tpu.matmul %41, %3, %cst_18 {dimension_numbers = #tpu.dot_dimension_numbers<[1], [0], [0], [1], [0, 0, 1, 1], [], []>} : vector<16x384xbf16>, vector<384x128xbf16>, vector<16x128xf32> -> vector<16x128xf32>
    %43 = vector.broadcast %1 : vector<1x128xf32> to vector<16x128xf32>
    %44 = arith.addf %42, %43 : vector<16x128xf32>
    %cst_19 = arith.constant 0.000000e+00 : f32
    %45 = vector.broadcast %cst_19 : f32 to vector<16x128xf32>
    %46 = arith.maximumf %44, %45 : vector<16x128xf32>
    %47 = arith.truncf %46 : vector<16x128xf32> to vector<16x128xbf16>
    %48 = tpu.concatenate %6, %47, %6 in 0 : vector<1x128xbf16>, vector<16x128xbf16>, vector<1x128xbf16> -> vector<18x128xbf16>
    %49 = vector.extract_strided_slice %48 {offsets = [0, 0], sizes = [16, 128], strides = [1, 1]} : vector<18x128xbf16> to vector<16x128xbf16>
    %50 = vector.extract_strided_slice %48 {offsets = [1, 0], sizes = [16, 128], strides = [1, 1]} : vector<18x128xbf16> to vector<16x128xbf16>
    %51 = vector.extract_strided_slice %48 {offsets = [2, 0], sizes = [16, 128], strides = [1, 1]} : vector<18x128xbf16> to vector<16x128xbf16>
    %52 = tpu.concatenate %49, %50, %51 in 1 : vector<16x128xbf16>, vector<16x128xbf16>, vector<16x128xbf16> -> vector<16x384xbf16>
    %cst_20 = arith.constant dense<0.000000e+00> : vector<16x128xf32>
    %53 = tpu.matmul %52, %4, %cst_20 {dimension_numbers = #tpu.dot_dimension_numbers<[1], [0], [0], [1], [0, 0, 1, 1], [], []>} : vector<16x384xbf16>, vector<384x128xbf16>, vector<16x128xf32> -> vector<16x128xf32>
    %54 = vector.broadcast %2 : vector<1x128xf32> to vector<16x128xf32>
    %55 = arith.addf %53, %54 : vector<16x128xf32>
    %56 = arith.extf %36 : vector<16x128xbf16> to vector<16x128xf32>
    %57 = arith.addf %55, %56 : vector<16x128xf32>
    %cst_21 = arith.constant 0.000000e+00 : f32
    %58 = vector.broadcast %cst_21 : f32 to vector<16x128xf32>
    %59 = arith.maximumf %57, %58 : vector<16x128xf32>
    %c1_22 = arith.constant 1 : index
    %c0_23 = arith.constant 0 : index
    %c0_24 = arith.constant 0 : index
    %60 = vector.load %arg5[%c1_22, %c0_23, %c0_24] : memref<2x16x128xf32, #tpu.memory_space<vmem>>, vector<1x16x128xf32>
    %61 = vector.shape_cast %60 : vector<1x16x128xf32> to vector<16x128xf32>
    %62 = vector.shape_cast %59 : vector<16x128xf32> to vector<1x16x128xf32>
    tpu.vector_store %arg5[%c1_22, %c0_23, %c0_24], %62 {strides = array<i32>} : memref<2x16x128xf32, #tpu.memory_space<vmem>>, vector<1x16x128xf32>,
    return
  }
  func.func @transform_0(%arg0: i32) -> (i32, i32, i32) {
    %c0_i32 = arith.constant 0 : i32
    %c0_i32_0 = arith.constant 0 : i32
    %c0_i32_1 = arith.constant 0 : i32
    return %arg0, %c0_i32, %c0_i32_0 : i32, i32, i32
  }
  func.func @transform_1(%arg0: i32) -> (i32, i32) {
    %c0_i32 = arith.constant 0 : i32
    %c0_i32_0 = arith.constant 0 : i32
    %c0_i32_1 = arith.constant 0 : i32
    return %c0_i32, %c0_i32_0 : i32, i32
  }
  func.func @transform_2(%arg0: i32) -> (i32, i32) {
    %c0_i32 = arith.constant 0 : i32
    %c0_i32_0 = arith.constant 0 : i32
    %c0_i32_1 = arith.constant 0 : i32
    return %c0_i32, %c0_i32_0 : i32, i32
  }
  func.func @transform_3(%arg0: i32) -> (i32, i32) {
    %c0_i32 = arith.constant 0 : i32
    %c0_i32_0 = arith.constant 0 : i32
    %c0_i32_1 = arith.constant 0 : i32
    return %c0_i32, %c0_i32_0 : i32, i32
  }
  func.func @transform_4(%arg0: i32) -> (i32, i32, i32) {
    %c0_i32 = arith.constant 0 : i32
    %c0_i32_0 = arith.constant 0 : i32
    %c0_i32_1 = arith.constant 0 : i32
    return %arg0, %c0_i32, %c0_i32_0 : i32, i32, i32
  }
}

</mosaic_0001>

<llo_original>
// kernel: tpu_custom_call.1
$region0: #{tpu_custom_call.1}
  #allocation0 [shape = 'u32[]', space=smem, size = 0x4, offset = 0x4, fixed_abs, tag = 'smem constant byte address 0x4 - core index']
  #allocation1 [shape = 'u32[144,128]{1,0:T(1,128)}', space=vmem, size = 0x12000, scoped, tag = 'internal scratch']
  %s0 = inlined_call_operand.hbm [shape: bf16[4,16,128], index: 0, kind: input, shape index: {}]
  %s1 = inlined_call_operand.hbm [shape: bf16[384,128], index: 1, kind: input, shape index: {}]
  %s2 = inlined_call_operand.hbm [shape: bf16[384,128], index: 2, kind: input, shape index: {}]
  %s3 = inlined_call_operand.vmem [shape: f32[2,128], index: 3, kind: input, shape index: {}]
  %s4 = inlined_call_operand.hbm [shape: f32[4,16,128], index: 4, kind: output, shape index: {}]
  %s5 = sld [smem:[#allocation0]]
  $region61: #{tpu_custom_call.1} parent=0
    _
  %s7 = ssub.s32 1, %s5
  %s8 = scalar_select 0, %s7, %s5
  $region1: #{tpu_custom_call.1} parent=0
    #allocation2 [shape = 'u8[16384]{0}', space=vmem, size = 0x4000, scoped, tag = 'input window, operand 0']
    #allocation3 [shape = 's32[2]{0}', space=sflag, size = 0x8, scoped, tag = 'scoped memory for tpu_custom_call.1']
    #allocation4 [shape = 's32[2]{0}', space=sflag, size = 0x8, scoped, tag = 'scoped memory for tpu_custom_call.1']
    #allocation5 [shape = 'u8[98304]{0}', space=vmem, size = 0x18000, scoped, tag = 'input window, operand 1, single buffered']
    #allocation6 [shape = 's32[1]{0}', space=sflag, size = 0x4, scoped, tag = 'scoped memory for tpu_custom_call.1']
    #allocation7 [shape = 'u8[98304]{0}', space=vmem, size = 0x18000, scoped, tag = 'input window, operand 2, single buffered']
    #allocation8 [shape = 'u8[32768]{0}', space=vmem, size = 0x8000, scoped, tag = 'output window, operand 0']
    %9 = vsyncpa [#allocation3], 0
    %s10 = scalar_lea.sflag [#allocation3], 1
    %11 = vsyncpa %s10, 0
    %12 = vsyncpa [#allocation6], 0
    %13 = vsyncpa [#allocation4], 0
    %s14 = scalar_lea.sflag [#allocation4], 1
    %15 = vsyncpa %s14, 0
    loop: start=0, step=1, limit=4
    $region2: #{tpu_custom_call.1} parent=1 // loop_pre_header
      _
    $region3: #{tpu_custom_call.1} parent=1 // loop_header
      %s17 = sphi 0, %s21
      %p18 = scmp.ge.s32.totalorder %s17, 4
      %s27 = sphi 0, %s29
      %s30 = sphi 0, %s27
      %s31 = sphi 0, %s30
      %s47 = sphi 0, %s31
      %s51 = sphi 0, %s51
      %s53 = sphi 0, %s51
      %s54 = sphi 0, %s53
      %s68 = sphi 0, %s54
      %s72 = sphi 0, %s72
      %s74 = sphi 0, %s72
      %s75 = sphi 0, %s74
      %s89 = sphi 0, %s75
      %s93 = sphi 0, %s93
      %s95 = sphi 0, %s93
      %s96 = sphi 0, %s95
      %s110 = sphi 0, %s96
      %s116 = sphi 0, %s118
      %s119 = sphi 0, %s116
      %s120 = sphi 0, %s119
      %s136 = sphi 0, %s120
    $region4: #{tpu_custom_call.1} parent=1 // loop_header_branch
      %20 = sbr.rel (%p18) target = $region8
    $region5: #{tpu_custom_call.1} parent=1 // loop_body
      %s22 = ssub.s32 %s17, 1
      %s23 = ssub.s32 %s17, 2
      %s24 = sadd.s32 %s17, 1
      %s25 = ssub.s32 %s17, %s24
      %p26 = scmp.eq.s32.totalorder %s25, 0
      %s28 = sadd.s32 %s27, 1
      %s29 = scalar_select %p26, %s27, %s28
      %p32 = pneg %p26
      %p33 = scmp.eq.s32.totalorder %s17, 1
      %p34 = por %p32, %p33
      %p35 = scmp.ne.s32.totalorder %s27, %s30
      %p36 = scmp.eq.s32.totalorder %s17, 0
      %p37 = por %p35, %p36
      %p38 = scmp.ne.s32.totalorder %s27, %s30
      %p39 = scmp.eq.s32.totalorder %s22, 1
      %p40 = por %p38, %p39
      %p41 = scmp.ne.s32.totalorder %s30, %s31
      %p42 = scmp.eq.s32.totalorder %s22, 0
      %p43 = por %p41, %p42
      %p44 = scmp.ne.s32.totalorder %s30, %s31
      %p45 = scmp.eq.s32.totalorder %s23, 1
      %p46 = por %p44, %p45
      %p48 = scmp.ne.s32.totalorder %s31, %s47
      %p49 = scmp.eq.s32.totalorder %s23, 0
      %p50 = por %p48, %p49
      %s52 = sadd.s32 %s51, 1
      %p55 = scmp.eq.s32.totalorder %s17, 1
      %p56 = scmp.ne.s32.totalorder %s51, %s53
      %p57 = scmp.eq.s32.totalorder %s17, 0
      %p58 = por %p56, %p57
      %p59 = scmp.ne.s32.totalorder %s51, %s53
      %p60 = scmp.eq.s32.totalorder %s22, 1
      %p61 = por %p59, %p60
      %p62 = scmp.ne.s32.totalorder %s53, %s54
      %p63 = scmp.eq.s32.totalorder %s22, 0
      %p64 = por %p62, %p63
      %p65 = scmp.ne.s32.totalorder %s53, %s54
      %p66 = scmp.eq.s32.totalorder %s23, 1
      %p67 = por %p65, %p66
      %p69 = scmp.ne.s32.totalorder %s54, %s68
      %p70 = scmp.eq.s32.totalorder %s23, 0
      %p71 = por %p69, %p70
      %s73 = sadd.s32 %s72, 1
      %p76 = scmp.eq.s32.totalorder %s17, 1
      %p77 = scmp.ne.s32.totalorder %s72, %s74
      %p78 = scmp.eq.s32.totalorder %s17, 0
      %p79 = por %p77, %p78
      %p80 = scmp.ne.s32.totalorder %s72, %s74
      %p81 = scmp.eq.s32.totalorder %s22, 1
      %p82 = por %p80, %p81
      %p83 = scmp.ne.s32.totalorder %s74, %s75
      %p84 = scmp.eq.s32.totalorder %s22, 0
      %p85 = por %p83, %p84
      %p86 = scmp.ne.s32.totalorder %s74, %s75
      %p87 = scmp.eq.s32.totalorder %s23, 1
      %p88 = por %p86, %p87
      %p90 = scmp.ne.s32.totalorder %s75, %s89
      %p91 = scmp.eq.s32.totalorder %s23, 0
      %p92 = por %p90, %p91
      %s94 = sadd.s32 %s93, 1
      %p97 = scmp.eq.s32.totalorder %s17, 1
      %p98 = scmp.ne.s32.totalorder %s93, %s95
      %p99 = scmp.eq.s32.totalorder %s17, 0
      %p100 = por %p98, %p99
      %p101 = scmp.ne.s32.totalorder %s93, %s95
      %p102 = scmp.eq.s32.totalorder %s22, 1
      %p103 = por %p101, %p102
      %p104 = scmp.ne.s32.totalorder %s95, %s96
      %p105 = scmp.eq.s32.totalorder %s22, 0
      %p106 = por %p104, %p105
      %p107 = scmp.ne.s32.totalorder %s95, %s96
      %p108 = scmp.eq.s32.totalorder %s23, 1
      %p109 = por %p107, %p108
      %p111 = scmp.ne.s32.totalorder %s96, %s110
      %p112 = scmp.eq.s32.totalorder %s23, 0
      %p113 = por %p111, %p112
      %s114 = ssub.s32 %s17, %s24
      %p115 = scmp.eq.s32.totalorder %s114, 0
      %s117 = sadd.s32 %s116, 1
      %s118 = scalar_select %p115, %s116, %s117
      %p121 = pneg %p115
      %p122 = scmp.eq.s32.totalorder %s17, 1
      %p123 = por %p121, %p122
      %p124 = scmp.ne.s32.totalorder %s116, %s119
      %p125 = scmp.eq.s32.totalorder %s17, 0
      %p126 = por %p124, %p125
      %p127 = scmp.ne.s32.totalorder %s116, %s119
      %p128 = scmp.eq.s32.totalorder %s22, 1
      %p129 = por %p127, %p128
      %p130 = scmp.ne.s32.totalorder %s119, %s120
      %p131 = scmp.eq.s32.totalorder %s22, 0
      %p132 = por %p130, %p131
      %p133 = scmp.ne.s32.totalorder %s119, %s120
      %p134 = scmp.eq.s32.totalorder %s23, 1
      %p135 = por %p133, %p134
      %p137 = scmp.ne.s32.totalorder %s120, %s136
      %p138 = scmp.eq.s32.totalorder %s23, 0
      %p139 = por %p137, %p138
      %p140 = scmp.le.s32.totalorder 1, %s17
      %p141 = scmp.lt.s32.totalorder %s17, 3
      %p142 = pnand %p140, %p141
      %p143 = pneg %p142
      // Predicated region
      $region9: #{tpu_custom_call.1} parent=5 // pred_check
        _
      $region10: #{tpu_custom_call.1} parent=5 // pred_check_branch
        %145 = sbr.rel (%p142) target = $region12
      $region11: #{tpu_custom_call.1} parent=5 // pred_region
        %s146 = ssub.s32 %s17, 1
        // Predicated region
        $region13: #{tpu_custom_call.1} parent=11 // pred_check
          %p147 = pneg %p64
        $region14: #{tpu_custom_call.1} parent=11 // pred_check_branch
          %149 = sbr.rel (%p147) target = $region16
        $region15: #{tpu_custom_call.1} parent=11 // pred_region
          %s151 = ssub.s32 3072, 3072
          %152 = vsyncadd [#allocation6], %s151
          %s153 = sshll.u32 [#allocation5], 4
          %s154 = int_to_ptr.vmem [resolvable:$true] %s153
          %159 = dma.hbm_to_vmem [thread:$0]  %s1, 3072, %s154, [#allocation6], 64, 64, 4
        $region16: #{tpu_custom_call.1} parent=11 // pred_fallthru
          _
        // Predicated region
        $region17: #{tpu_custom_call.1} parent=11 // pred_check
          %p160 = pneg %p85
        $region18: #{tpu_custom_call.1} parent=11 // pred_check_branch
          %162 = sbr.rel (%p160) target = $region20
        $region19: #{tpu_custom_call.1} parent=11 // pred_region
          %s164 = ssub.s32 3072, 3072
          %165 = vsyncadd [#allocation6], %s164
          %s166 = sshll.u32 [#allocation7], 4
          %s167 = int_to_ptr.vmem [resolvable:$true] %s166
          %172 = dma.hbm_to_vmem [thread:$0]  %s2, 3072, %s167, [#allocation6], 64, 64, 4
        $region20: #{tpu_custom_call.1} parent=11 // pred_fallthru
          _
        // Predicated region
        $region21: #{tpu_custom_call.1} parent=11 // pred_check
          %p173 = pneg %p106
        $region22: #{tpu_custom_call.1} parent=11 // pred_check_branch
          %175 = sbr.rel (%p173) target = $region24
        $region23: #{tpu_custom_call.1} parent=11 // pred_region
          _
        $region24: #{tpu_custom_call.1} parent=11 // pred_fallthru
          _
      $region12: #{tpu_custom_call.1} parent=5 // pred_fallthru
        _
      %p176 = scmp.lt.s32.totalorder %s17, 2
      // Predicated region
      $region25: #{tpu_custom_call.1} parent=5 // pred_check
        %p177 = pneg %p176
      $region26: #{tpu_custom_call.1} parent=5 // pred_check_branch
        %179 = sbr.rel (%p177) target = $region28
      $region27: #{tpu_custom_call.1} parent=5 // pred_region
        // Predicated region
        $region29: #{tpu_custom_call.1} parent=27 // pred_check
          %p180 = pneg %p37
        $region30: #{tpu_custom_call.1} parent=27 // pred_check_branch
          %182 = sbr.rel (%p180) target = $region32
        $region31: #{tpu_custom_call.1} parent=27 // pred_region
          %s183 = sand.u32 %s27, 1
          %s184 = scalar_lea.sflag [#allocation3], %s183
          %s185 = sand.u32 %s27, 1
          %s186 = smul.addr %s185, 16
          %s187 = scalar_lea.vmem [#allocation2], %s186
          %s188 = smul.u32 2, %s17
          %s190 = ssub.s32 256, 256
          %191 = vsyncadd %s184, %s190
          %s192 = smul.addr %s188, 2
          %s193 = smul.addr %s192, 64
          %s194 = scalar_lea.hbm %s0, %s193
          %s195 = sshll.u32 %s187, 4
          %s196 = int_to_ptr.vmem [resolvable:$true] %s195
          %201 = dma.hbm_to_vmem [thread:$0]  %s194, 256, %s196, %s184, 64, 64, 4
        $region32: #{tpu_custom_call.1} parent=27 // pred_fallthru
          _
      $region28: #{tpu_custom_call.1} parent=5 // pred_fallthru
        _
      %p202 = scmp.le.s32.totalorder 1, %s17
      %p203 = scmp.lt.s32.totalorder %s17, 3
      %p204 = pnand %p202, %p203
      %p205 = pneg %p204
      // Predicated region
      $region33: #{tpu_custom_call.1} parent=5 // pred_check
        _
      $region34: #{tpu_custom_call.1} parent=5 // pred_check_branch
        %207 = sbr.rel (%p204) target = $region36
      $region35: #{tpu_custom_call.1} parent=5 // pred_region
        %s208 = ssub.s32 %s17, 1
        %s209 = sand.u32 %s30, 1
        %s210 = scalar_lea.sflag [#allocation3], %s209
        %s211 = sand.u32 %s30, 1
        %s212 = smul.addr %s211, 16
        %s213 = scalar_lea.vmem [#allocation2], %s212
        // Predicated region
        $region37: #{tpu_custom_call.1} parent=35 // pred_check
          %p214 = pneg %p43
        $region38: #{tpu_custom_call.1} parent=35 // pred_check_branch
          %216 = sbr.rel (%p214) target = $region40
        $region39: #{tpu_custom_call.1} parent=35 // pred_region
          %217 = dma.done %s210, 256
        $region40: #{tpu_custom_call.1} parent=35 // pred_fallthru
          _
        // Predicated region
        $region41: #{tpu_custom_call.1} parent=35 // pred_check
          %p218 = pneg %p64
        $region42: #{tpu_custom_call.1} parent=35 // pred_check_branch
          %220 = sbr.rel (%p218) target = $region44
        $region43: #{tpu_custom_call.1} parent=35 // pred_region
          %221 = dma.done [#allocation6], 3072
        $region44: #{tpu_custom_call.1} parent=35 // pred_fallthru
          _
        // Predicated region
        $region45: #{tpu_custom_call.1} parent=35 // pred_check
          %p222 = pneg %p85
        $region46: #{tpu_custom_call.1} parent=35 // pred_check_branch
          %224 = sbr.rel (%p222) target = $region48
        $region47: #{tpu_custom_call.1} parent=35 // pred_region
          %225 = dma.done [#allocation6], 3072
        $region48: #{tpu_custom_call.1} parent=35 // pred_fallthru
          _
        %s226 = sand.u32 %s30, 1
        %s227 = scalar_lea.sflag [#allocation3], %s226
        %s228 = sand.u32 %s30, 1
        %s229 = smul.addr %s228, 16
        %s230 = scalar_lea.vmem [#allocation2], %s229
        %p231 = pneg %p43
        %p232 = pneg %p40
        %p233 = pneg %p64
        %p234 = pneg %p61
        %p235 = pneg %p85
        %p236 = pneg %p82
        %p237 = pneg %p106
        %p238 = pneg %p103
        %p239 = pneg %p132
        %p240 = pneg %p129
        %s241 = sand.u32 %s119, 1
        %s242 = scalar_lea.sflag [#allocation4], %s241
        %s243 = sand.u32 %s119, 1
        %s244 = smul.addr %s243, 32
        %s245 = scalar_lea.vmem [#allocation8], %s244
        %s246 = smul.u32 2, %s22
        %s247 = smul.u32 2, %s22
        %v249 = vld [vmem:[%s3] sm:$0x3]
        %v250 = vld [vmem:[#allocation5] sm:$0xf]
        %v251 = vld [vmem:[#allocation5 + $0x4] sm:$0xf]
        %v252 = vld [vmem:[#allocation5 + $0x8] sm:$0xf]
        %v253 = vld [vmem:[#allocation5 + $0xc] sm:$0xf]
        %v254 = vld [vmem:[#allocation5 + $0x10] sm:$0xf]
        %v255 = vld [vmem:[#allocation5 + $0x14] sm:$0xf]
        %v256 = vld [vmem:[#allocation5 + $0x18] sm:$0xf]
        %v257 = vld [vmem:[#allocation5 + $0x1c] sm:$0xf]
        %v258 = vld [vmem:[#allocation5 + $0x20] sm:$0xf]
        %v259 = vld [vmem:[#allocation5 + $0x24] sm:$0xf]
        %v260 = vld [vmem:[#allocation5 + $0x28] sm:$0xf]
        %v261 = vld [vmem:[#allocation5 + $0x2c] sm:$0xf]
        %v262 = vld [vmem:[#allocation5 + $0x30] sm:$0xf]
        %v263 = vld [vmem:[#allocation5 + $0x34] sm:$0xf]
        %v264 = vld [vmem:[#allocation5 + $0x38] sm:$0xf]
        %v265 = vld [vmem:[#allocation5 + $0x3c] sm:$0xf]
        %v266 = vld [vmem:[#allocation5 + $0x40] sm:$0xf]
        %v267 = vld [vmem:[#allocation5 + $0x44] sm:$0xf]
        %v268 = vld [vmem:[#allocation5 + $0x48] sm:$0xf]
        %v269 = vld [vmem:[#allocation5 + $0x4c] sm:$0xf]
        %v270 = vld [vmem:[#allocation5 + $0x50] sm:$0xf]
        %v271 = vld [vmem:[#allocation5 + $0x54] sm:$0xf]
        %v272 = vld [vmem:[#allocation5 + $0x58] sm:$0xf]
        %v273 = vld [vmem:[#allocation5 + $0x5c] sm:$0xf]
        %v274 = vld [vmem:[#allocation5 + $0x60] sm:$0xf]
        %v275 = vld [vmem:[#allocation5 + $0x64] sm:$0xf]
        %v276 = vld [vmem:[#allocation5 + $0x68] sm:$0xf]
        %v277 = vld [vmem:[#allocation5 + $0x6c] sm:$0xf]
        %v278 = vld [vmem:[#allocation5 + $0x70] sm:$0xf]
        %v279 = vld [vmem:[#allocation5 + $0x74] sm:$0xf]
        %v280 = vld [vmem:[#allocation5 + $0x78] sm:$0xf]
        %v281 = vld [vmem:[#allocation5 + $0x7c] sm:$0xf]
        %v282 = vld [vmem:[#allocation5 + $0x80] sm:$0xf]
        %v283 = vld [vmem:[#allocation5 + $0x84] sm:$0xf]
        %v284 = vld [vmem:[#allocation5 + $0x88] sm:$0xf]
        %v285 = vld [vmem:[#allocation5 + $0x8c] sm:$0xf]
        %v286 = vld [vmem:[#allocation5 + $0x90] sm:$0xf]
        %v287 = vld [vmem:[#allocation5 + $0x94] sm:$0xf]
        %v288 = vld [vmem:[#allocation5 + $0x98] sm:$0xf]
        %v289 = vld [vmem:[#allocation5 + $0x9c] sm:$0xf]
        %v290 = vld [vmem:[#allocation5 + $0xa0] sm:$0xf]
        %v291 = vld [vmem:[#allocation5 + $0xa4] sm:$0xf]
        %v292 = vld [vmem:[#allocation5 + $0xa8] sm:$0xf]
        %v293 = vld [vmem:[#allocation5 + $0xac] sm:$0xf]
        %v294 = vld [vmem:[#allocation5 + $0xb0] sm:$0xf]
        %v295 = vld [vmem:[#allocation5 + $0xb4] sm:$0xf]
        %v296 = vld [vmem:[#allocation5 + $0xb8] sm:$0xf]
        %v297 = vld [vmem:[#allocation5 + $0xbc] sm:$0xf]
        %v298 = vld [vmem:[#allocation7] sm:$0xf]
        %v299 = vld [vmem:[#allocation7 + $0x4] sm:$0xf]
        %v300 = vld [vmem:[#allocation7 + $0x8] sm:$0xf]
        %v301 = vld [vmem:[#allocation7 + $0xc] sm:$0xf]
        %v302 = vld [vmem:[#allocation7 + $0x10] sm:$0xf]
        %v303 = vld [vmem:[#allocation7 + $0x14] sm:$0xf]
        %v304 = vld [vmem:[#allocation7 + $0x18] sm:$0xf]
        %v305 = vld [vmem:[#allocation7 + $0x1c] sm:$0xf]
        %v306 = vld [vmem:[#allocation7 + $0x20] sm:$0xf]
        %v307 = vld [vmem:[#allocation7 + $0x24] sm:$0xf]
        %v308 = vld [vmem:[#allocation7 + $0x28] sm:$0xf]
        %v309 = vld [vmem:[#allocation7 + $0x2c] sm:$0xf]
        %v310 = vld [vmem:[#allocation7 + $0x30] sm:$0xf]
        %v311 = vld [vmem:[#allocation7 + $0x34] sm:$0xf]
        %v312 = vld [vmem:[#allocation7 + $0x38] sm:$0xf]
        %v313 = vld [vmem:[#allocation7 + $0x3c] sm:$0xf]
        %v314 = vld [vmem:[#allocation7 + $0x40] sm:$0xf]
        %v315 = vld [vmem:[#allocation7 + $0x44] sm:$0xf]
        %v316 = vld [vmem:[#allocation7 + $0x48] sm:$0xf]
        %v317 = vld [vmem:[#allocation7 + $0x4c] sm:$0xf]
        %v318 = vld [vmem:[#allocation7 + $0x50] sm:$0xf]
        %v319 = vld [vmem:[#allocation7 + $0x54] sm:$0xf]
        %v320 = vld [vmem:[#allocation7 + $0x58] sm:$0xf]
        %v321 = vld [vmem:[#allocation7 + $0x5c] sm:$0xf]
        %v322 = vld [vmem:[#allocation7 + $0x60] sm:$0xf]
        %v323 = vld [vmem:[#allocation7 + $0x64] sm:$0xf]
        %v324 = vld [vmem:[#allocation7 + $0x68] sm:$0xf]
        %v325 = vld [vmem:[#allocation7 + $0x6c] sm:$0xf]
        %v326 = vld [vmem:[#allocation7 + $0x70] sm:$0xf]
        %v327 = vld [vmem:[#allocation7 + $0x74] sm:$0xf]
        %v328 = vld [vmem:[#allocation7 + $0x78] sm:$0xf]
        %v329 = vld [vmem:[#allocation7 + $0x7c] sm:$0xf]
        %v330 = vld [vmem:[#allocation7 + $0x80] sm:$0xf]
        %v331 = vld [vmem:[#allocation7 + $0x84] sm:$0xf]
        %v332 = vld [vmem:[#allocation7 + $0x88] sm:$0xf]
        %v333 = vld [vmem:[#allocation7 + $0x8c] sm:$0xf]
        %v334 = vld [vmem:[#allocation7 + $0x90] sm:$0xf]
        %v335 = vld [vmem:[#allocation7 + $0x94] sm:$0xf]
        %v336 = vld [vmem:[#allocation7 + $0x98] sm:$0xf]
        %v337 = vld [vmem:[#allocation7 + $0x9c] sm:$0xf]
        %v338 = vld [vmem:[#allocation7 + $0xa0] sm:$0xf]
        %v339 = vld [vmem:[#allocation7 + $0xa4] sm:$0xf]
        %v340 = vld [vmem:[#allocation7 + $0xa8] sm:$0xf]
        %v341 = vld [vmem:[#allocation7 + $0xac] sm:$0xf]
        %v342 = vld [vmem:[#allocation7 + $0xb0] sm:$0xf]
        %v343 = vld [vmem:[#allocation7 + $0xb4] sm:$0xf]
        %v344 = vld [vmem:[#allocation7 + $0xb8] sm:$0xf]
        %v345 = vld [vmem:[#allocation7 + $0xbc] sm:$0xf]
        %v346 = vld [vmem:[%s213] sm:$0xf]
        %v347 = vld [vmem:[%s213 + $0x4] sm:$0xf]
        %v350 = vunpack.c.l.b16 %v346
        %v351 = vunpack.c.l.b16 %v347
        %v352 = vpack.c.b16 %v351, %v350
        %v354 = vshrl.u32 %v352, 16
        %v356 = vrot.slane %v354, 7
        %v357 = vshll.u32 %v352, 16
        %v359 = vor.u32 %v356, %v357
        %vm362 = vcmask 1040384
        %vm363 = vsmask.f32 256
        %vm364 = vmand %vm362, %vm363
        %v365 = vsel %vm364, 0, %v359
        %v366 = vsel %vm364, %v356, 0
        %vm367 = vsmask.f32 7424
        %v369 = vshrl.u32 %v365, 16
        %v371 = vshll.u32 %v365, 16
        %v373 = vrot.slane %v371, 1
        %v374 = vor.u32 %v369, %v373
        %v376 = vshll.u32 %v366, 16
        %v378 = vrot.slane %v376, 1
        %v379 = vsel %vm367, %v374, %v378
        %vm383 = vcmask 1046528
        %v384 = vrot.slane %v365, 1
        %v385 = vrot.slane %v366, 1
        %v386 = vsel %vm383, %v384, %v385
        %v388 = vlaneseq
        %v389 = vshrl.u32 %v388, 7
        %v390 = vsub.s32 0, %v389
        %v391 = vrot.slane %v249, %v390
        %v440 = vunpack.c.l.b16 %v250
        %v441 = vunpack.c.l.b16 %v251
        %v442 = vunpack.c.l.b16 %v252
        %v443 = vunpack.c.l.b16 %v253
        %v444 = vunpack.c.l.b16 %v254
        %v445 = vunpack.c.l.b16 %v255
        %v446 = vunpack.c.l.b16 %v256
        %v447 = vunpack.c.l.b16 %v257
        %v448 = vunpack.c.l.b16 %v258
        %v449 = vunpack.c.l.b16 %v259
        %v450 = vunpack.c.l.b16 %v260
        %v451 = vunpack.c.l.b16 %v261
        %v452 = vunpack.c.l.b16 %v262
        %v453 = vunpack.c.l.b16 %v263
        %v454 = vunpack.c.l.b16 %v264
        %v455 = vunpack.c.l.b16 %v265
        %v456 = vunpack.c.l.b16 %v266
        %v457 = vunpack.c.l.b16 %v267
        %v458 = vunpack.c.l.b16 %v268
        %v459 = vunpack.c.l.b16 %v269
        %v460 = vunpack.c.l.b16 %v270
        %v461 = vunpack.c.l.b16 %v271
        %v462 = vunpack.c.l.b16 %v272
        %v463 = vunpack.c.l.b16 %v273
        %v464 = vunpack.c.l.b16 %v274
        %v465 = vunpack.c.l.b16 %v275
        %v466 = vunpack.c.l.b16 %v276
        %v467 = vunpack.c.l.b16 %v277
        %v468 = vunpack.c.l.b16 %v278
        %v469 = vunpack.c.l.b16 %v279
        %v470 = vunpack.c.l.b16 %v280
        %v471 = vunpack.c.l.b16 %v281
        %v472 = vunpack.c.l.b16 %v282
        %v473 = vunpack.c.l.b16 %v283
        %v474 = vunpack.c.l.b16 %v284
        %v475 = vunpack.c.l.b16 %v285
        %v476 = vunpack.c.l.b16 %v286
        %v477 = vunpack.c.l.b16 %v287
        %v478 = vunpack.c.l.b16 %v288
        %v479 = vunpack.c.l.b16 %v289
        %v480 = vunpack.c.l.b16 %v290
        %v481 = vunpack.c.l.b16 %v291
        %v482 = vunpack.c.l.b16 %v292
        %v483 = vunpack.c.l.b16 %v293
        %v484 = vunpack.c.l.b16 %v294
        %v485 = vunpack.c.l.b16 %v295
        %v486 = vunpack.c.l.b16 %v296
        %v487 = vunpack.c.l.b16 %v297
        %v488 = vpack.c.b16 %v441, %v440
        %v489 = vpack.c.b16 %v443, %v442
        %v490 = vpack.c.b16 %v445, %v444
        %v491 = vpack.c.b16 %v447, %v446
        %v492 = vpack.c.b16 %v449, %v448
        %v493 = vpack.c.b16 %v451, %v450
        %v494 = vpack.c.b16 %v453, %v452
        %v495 = vpack.c.b16 %v455, %v454
        %v496 = vpack.c.b16 %v457, %v456
        %v497 = vpack.c.b16 %v459, %v458
        %v498 = vpack.c.b16 %v461, %v460
        %v499 = vpack.c.b16 %v463, %v462
        %v500 = vpack.c.b16 %v465, %v464
        %v501 = vpack.c.b16 %v467, %v466
        %v502 = vpack.c.b16 %v469, %v468
        %v503 = vpack.c.b16 %v471, %v470
        %v504 = vpack.c.b16 %v473, %v472
        %v505 = vpack.c.b16 %v475, %v474
        %v506 = vpack.c.b16 %v477, %v476
        %v507 = vpack.c.b16 %v479, %v478
        %v508 = vpack.c.b16 %v481, %v480
        %v509 = vpack.c.b16 %v483, %v482
        %v510 = vpack.c.b16 %v485, %v484
        %v511 = vpack.c.b16 %v487, %v486
        %536 = vmatprep.subr.bf16.mxu0 0
        %537 = vmatpush1.bf16.msra.mxu0 %v488
        %538 = vmatprep.subr.bf16.mxu0 0
        %539 = vmatpush1.bf16.msra.mxu0 %v489
        %540 = vmatprep.subr.bf16.mxu0 0
        %541 = vmatpush1.bf16.msra.mxu0 %v490
        %542 = vmatprep.subr.bf16.mxu0 0
        %543 = vmatpush1.bf16.msra.mxu0 %v491
        %544 = vmatprep.subr.bf16.mxu0 0
        %545 = vmatpush1.bf16.msra.mxu0 %v492
        %546 = vmatprep.subr.bf16.mxu0 0
        %547 = vmatpush1.bf16.msra.mxu0 %v493
        %548 = vmatprep.subr.bf16.mxu0 0
        %549 = vmatpush1.bf16.msra.mxu0 %v494
        %550 = vmatprep.subr.bf16.mxu0 0
        %551 = vmatpush1.bf16.msra.mxu0 %v495
        %552 = vmatprep.subr.bf16.mxu0 0
        %553 = vmatpush1.bf16.msra.mxu0 %v496
        %554 = vmatprep.subr.bf16.mxu0 0
        %555 = vmatpush1.bf16.msra.mxu0 %v497
        %556 = vmatprep.subr.bf16.mxu0 0
        %557 = vmatpush1.bf16.msra.mxu0 %v498
        %558 = vmatprep.subr.bf16.mxu0 0
        %559 = vmatpush1.bf16.msra.mxu0 %v499
        %560 = vmatprep.subr.bf16.mxu0 0
        %561 = vmatpush1.bf16.msra.mxu0 %v500
        %562 = vmatprep.subr.bf16.mxu0 0
        %563 = vmatpush1.bf16.msra.mxu0 %v501
        %564 = vmatprep.subr.bf16.mxu0 0
        %565 = vmatpush1.bf16.msra.mxu0 %v502
        %566 = vmatprep.subr.bf16.mxu0 0
        %567 = vmatpush1.bf16.msra.mxu0 %v503
        %568 = vmatprep.mubr.bf16.mxu0 %v379
        %569 = vmatmul.mubr.bf16.gmra.mrb[0].mxu0 %v365
        %v570 = vpop.f32.mrb[0].mxu0
        %v571 = vadd.f32 %v391, %v570
        %v572 = vpop.f32.mrb[0].mxu0
        %v573 = vpop.f32.mrb[0].mxu0
        %v574 = vadd.f32 %v391, %v573
        %v575 = vpop.f32.mrb[0].mxu0
        %576 = vdwg.mxu0
        %577 = vmatprep.subr.bf16.mxu0 0
        %578 = vmatpush1.bf16.msra.mxu0 %v504
        %579 = vmatprep.subr.bf16.mxu0 0
        %580 = vmatpush1.bf16.msra.mxu0 %v505
        %581 = vmatprep.subr.bf16.mxu0 0
        %582 = vmatpush1.bf16.msra.mxu0 %v506
        %583 = vmatprep.subr.bf16.mxu0 0
        %584 = vmatpush1.bf16.msra.mxu0 %v507
        %585 = vmatprep.subr.bf16.mxu0 0
        %586 = vmatpush1.bf16.msra.mxu0 %v508
        %587 = vmatprep.subr.bf16.mxu0 0
        %588 = vmatpush1.bf16.msra.mxu0 %v509
        %589 = vmatprep.subr.bf16.mxu0 0
        %590 = vmatpush1.bf16.msra.mxu0 %v510
        %591 = vmatprep.subr.bf16.mxu0 0
        %592 = vmatpush1.bf16.msra.mxu0 %v511
        %593 = vmatprep.subr.bf16.mxu0 0
        %594 = vmatpush1.bf16.msra.mxu0 0
        %595 = vmatprep.subr.bf16.mxu0 0
        %596 = vmatpush1.bf16.msra.mxu0 0
        %597 = vmatprep.subr.bf16.mxu0 0
        %598 = vmatpush1.bf16.msra.mxu0 0
        %599 = vmatprep.subr.bf16.mxu0 0
        %600 = vmatpush1.bf16.msra.mxu0 0
        %601 = vmatprep.subr.bf16.mxu0 0
        %602 = vmatpush1.bf16.msra.mxu0 0
        %603 = vmatprep.subr.bf16.mxu0 0
        %604 = vmatpush1.bf16.msra.mxu0 0
        %605 = vmatprep.subr.bf16.mxu0 0
        %606 = vmatpush1.bf16.msra.mxu0 0
        %607 = vmatprep.subr.bf16.mxu0 0
        %608 = vmatpush1.bf16.msra.mxu0 0
        %609 = vmatprep.mubr.bf16.mxu0 0
        %610 = vmatmul.mubr.bf16.gmra.mrb[0].mxu0 %v386
        %v611 = vpop.f32.mrb[0].mxu0
        %v612 = vadd.f32 %v571, %v611
        %v613 = vpop.f32.mrb[0].mxu0
        %v614 = vpop.f32.mrb[0].mxu0
        %v615 = vadd.f32 %v574, %v614
        %v616 = vpop.f32.mrb[0].mxu0
        %617 = vdwg.mxu0
        %v618 = vmax.f32 %v612, 0.0
        %v619 = vmax.f32 %v615, 0.0
        %v620 = vpack.c.bf16 %v619, %v618
        %v622 = vshrl.u32 %v620, 16
        %v624 = vrot.slane %v622, 7
        %v625 = vshll.u32 %v620, 16
        %v627 = vor.u32 %v624, %v625
        %v630 = vsel %vm364, 0, %v627
        %v631 = vsel %vm364, %v624, 0
        %v633 = vshrl.u32 %v630, 16
        %v635 = vshll.u32 %v630, 16
        %v637 = vrot.slane %v635, 1
        %v638 = vor.u32 %v633, %v637
        %v640 = vshll.u32 %v631, 16
        %v642 = vrot.slane %v640, 1
        %v643 = vsel %vm367, %v638, %v642
        %v647 = vrot.slane %v630, 1
        %v648 = vrot.slane %v631, 1
        %v649 = vsel %vm383, %v647, %v648
        %v651 = vlaneseq
        %v652 = vshrl.u32 %v651, 7
        %v653 = vsub.s32 1, %v652
        %v654 = vrot.slane %v249, %v653
        %v703 = vunpack.c.l.b16 %v298
        %v704 = vunpack.c.l.b16 %v299
        %v705 = vunpack.c.l.b16 %v300
        %v706 = vunpack.c.l.b16 %v301
        %v707 = vunpack.c.l.b16 %v302
        %v708 = vunpack.c.l.b16 %v303
        %v709 = vunpack.c.l.b16 %v304
        %v710 = vunpack.c.l.b16 %v305
        %v711 = vunpack.c.l.b16 %v306
        %v712 = vunpack.c.l.b16 %v307
        %v713 = vunpack.c.l.b16 %v308
        %v714 = vunpack.c.l.b16 %v309
        %v715 = vunpack.c.l.b16 %v310
        %v716 = vunpack.c.l.b16 %v311
        %v717 = vunpack.c.l.b16 %v312
        %v718 = vunpack.c.l.b16 %v313
        %v719 = vunpack.c.l.b16 %v314
        %v720 = vunpack.c.l.b16 %v315
        %v721 = vunpack.c.l.b16 %v316
        %v722 = vunpack.c.l.b16 %v317
        %v723 = vunpack.c.l.b16 %v318
        %v724 = vunpack.c.l.b16 %v319
        %v725 = vunpack.c.l.b16 %v320
        %v726 = vunpack.c.l.b16 %v321
        %v727 = vunpack.c.l.b16 %v322
        %v728 = vunpack.c.l.b16 %v323
        %v729 = vunpack.c.l.b16 %v324
        %v730 = vunpack.c.l.b16 %v325
        %v731 = vunpack.c.l.b16 %v326
        %v732 = vunpack.c.l.b16 %v327
        %v733 = vunpack.c.l.b16 %v328
        %v734 = vunpack.c.l.b16 %v329
        %v735 = vunpack.c.l.b16 %v330
        %v736 = vunpack.c.l.b16 %v331
        %v737 = vunpack.c.l.b16 %v332
        %v738 = vunpack.c.l.b16 %v333
        %v739 = vunpack.c.l.b16 %v334
        %v740 = vunpack.c.l.b16 %v335
        %v741 = vunpack.c.l.b16 %v336
        %v742 = vunpack.c.l.b16 %v337
        %v743 = vunpack.c.l.b16 %v338
        %v744 = vunpack.c.l.b16 %v339
        %v745 = vunpack.c.l.b16 %v340
        %v746 = vunpack.c.l.b16 %v341
        %v747 = vunpack.c.l.b16 %v342
        %v748 = vunpack.c.l.b16 %v343
        %v749 = vunpack.c.l.b16 %v344
        %v750 = vunpack.c.l.b16 %v345
        %v751 = vpack.c.b16 %v704, %v703
        %v752 = vpack.c.b16 %v706, %v705
        %v753 = vpack.c.b16 %v708, %v707
        %v754 = vpack.c.b16 %v710, %v709
        %v755 = vpack.c.b16 %v712, %v711
        %v756 = vpack.c.b16 %v714, %v713
        %v757 = vpack.c.b16 %v716, %v715
        %v758 = vpack.c.b16 %v718, %v717
        %v759 = vpack.c.b16 %v720, %v719
        %v760 = vpack.c.b16 %v722, %v721
        %v761 = vpack.c.b16 %v724, %v723
        %v762 = vpack.c.b16 %v726, %v725
        %v763 = vpack.c.b16 %v728, %v727
        %v764 = vpack.c.b16 %v730, %v729
        %v765 = vpack.c.b16 %v732, %v731
        %v766 = vpack.c.b16 %v734, %v733
        %v767 = vpack.c.b16 %v736, %v735
        %v768 = vpack.c.b16 %v738, %v737
        %v769 = vpack.c.b16 %v740, %v739
        %v770 = vpack.c.b16 %v742, %v741
        %v771 = vpack.c.b16 %v744, %v743
        %v772 = vpack.c.b16 %v746, %v745
        %v773 = vpack.c.b16 %v748, %v747
        %v774 = vpack.c.b16 %v750, %v749
        %799 = vmatprep.subr.bf16.mxu0 0
        %800 = vmatpush1.bf16.msra.mxu0 %v751
        %801 = vmatprep.subr.bf16.mxu0 0
        %802 = vmatpush1.bf16.msra.mxu0 %v752
        %803 = vmatprep.subr.bf16.mxu0 0
        %804 = vmatpush1.bf16.msra.mxu0 %v753
        %805 = vmatprep.subr.bf16.mxu0 0
        %806 = vmatpush1.bf16.msra.mxu0 %v754
        %807 = vmatprep.subr.bf16.mxu0 0
        %808 = vmatpush1.bf16.msra.mxu0 %v755
        %809 = vmatprep.subr.bf16.mxu0 0
        %810 = vmatpush1.bf16.msra.mxu0 %v756
        %811 = vmatprep.subr.bf16.mxu0 0
        %812 = vmatpush1.bf16.msra.mxu0 %v757
        %813 = vmatprep.subr.bf16.mxu0 0
        %814 = vmatpush1.bf16.msra.mxu0 %v758
        %815 = vmatprep.subr.bf16.mxu0 0
        %816 = vmatpush1.bf16.msra.mxu0 %v759
        %817 = vmatprep.subr.bf16.mxu0 0
        %818 = vmatpush1.bf16.msra.mxu0 %v760
        %819 = vmatprep.subr.bf16.mxu0 0
        %820 = vmatpush1.bf16.msra.mxu0 %v761
        %821 = vmatprep.subr.bf16.mxu0 0
        %822 = vmatpush1.bf16.msra.mxu0 %v762
        %823 = vmatprep.subr.bf16.mxu0 0
        %824 = vmatpush1.bf16.msra.mxu0 %v763
        %825 = vmatprep.subr.bf16.mxu0 0
        %826 = vmatpush1.bf16.msra.mxu0 %v764
        %827 = vmatprep.subr.bf16.mxu0 0
        %828 = vmatpush1.bf16.msra.mxu0 %v765
        %829 = vmatprep.subr.bf16.mxu0 0
        %830 = vmatpush1.bf16.msra.mxu0 %v766
        %831 = vmatprep.mubr.bf16.mxu0 %v643
        %832 = vmatmul.mubr.bf16.gmra.mrb[0].mxu0 %v630
        %v833 = vpop.f32.mrb[0].mxu0
        %v834 = vadd.f32 %v654, %v833
        %v835 = vpop.f32.mrb[0].mxu0
        %v836 = vpop.f32.mrb[0].mxu0
        %v837 = vadd.f32 %v654, %v836
        %v838 = vpop.f32.mrb[0].mxu0
        %839 = vdwg.mxu0
        %840 = vmatprep.subr.bf16.mxu0 0
        %841 = vmatpush1.bf16.msra.mxu0 %v767
        %842 = vmatprep.subr.bf16.mxu0 0
        %843 = vmatpush1.bf16.msra.mxu0 %v768
        %844 = vmatprep.subr.bf16.mxu0 0
        %845 = vmatpush1.bf16.msra.mxu0 %v769
        %846 = vmatprep.subr.bf16.mxu0 0
        %847 = vmatpush1.bf16.msra.mxu0 %v770
        %848 = vmatprep.subr.bf16.mxu0 0
        %849 = vmatpush1.bf16.msra.mxu0 %v771
        %850 = vmatprep.subr.bf16.mxu0 0
        %851 = vmatpush1.bf16.msra.mxu0 %v772
        %852 = vmatprep.subr.bf16.mxu0 0
        %853 = vmatpush1.bf16.msra.mxu0 %v773
        %854 = vmatprep.subr.bf16.mxu0 0
        %855 = vmatpush1.bf16.msra.mxu0 %v774
        %856 = vmatprep.subr.bf16.mxu0 0
        %857 = vmatpush1.bf16.msra.mxu0 0
        %858 = vmatprep.subr.bf16.mxu0 0
        %859 = vmatpush1.bf16.msra.mxu0 0
        %860 = vmatprep.subr.bf16.mxu0 0
        %861 = vmatpush1.bf16.msra.mxu0 0
        %862 = vmatprep.subr.bf16.mxu0 0
        %863 = vmatpush1.bf16.msra.mxu0 0
        %864 = vmatprep.subr.bf16.mxu0 0
        %865 = vmatpush1.bf16.msra.mxu0 0
        %866 = vmatprep.subr.bf16.mxu0 0
        %867 = vmatpush1.bf16.msra.mxu0 0
        %868 = vmatprep.subr.bf16.mxu0 0
        %869 = vmatpush1.bf16.msra.mxu0 0
        %870 = vmatprep.subr.bf16.mxu0 0
        %871 = vmatpush1.bf16.msra.mxu0 0
        %872 = vmatprep.mubr.bf16.mxu0 0
        %873 = vmatmul.mubr.bf16.gmra.mrb[0].mxu0 %v649
        %v874 = vpop.f32.mrb[0].mxu0
        %v875 = vadd.f32 %v834, %v874
        %v876 = vpop.f32.mrb[0].mxu0
        %v877 = vpop.f32.mrb[0].mxu0
        %v878 = vadd.f32 %v837, %v877
        %v879 = vpop.f32.mrb[0].mxu0
        %880 = vdwg.mxu0
        %v881 = vunpack.c.l.bf16 %v346
        %v882 = vunpack.c.l.bf16 %v347
        %v883 = vadd.f32 %v875, %v881
        %v884 = vadd.f32 %v878, %v882
        %v885 = vmax.f32 %v883, 0.0
        %v886 = vmax.f32 %v884, 0.0
        %887 = vst [vmem:[%s245] sm:$0xff] %v885
        %888 = vst [vmem:[%s245 + $0x8] sm:$0xff] %v886
        %s889 = scalar_lea.vmem %s213, 8 [#allocation2]
        %v890 = vld [vmem:[%s889] sm:$0xf]
        %v891 = vld [vmem:[%s889 + $0x4] sm:$0xf]
        %v894 = vunpack.c.l.b16 %v890
        %v895 = vunpack.c.l.b16 %v891
        %v896 = vpack.c.b16 %v895, %v894
        %v898 = vshrl.u32 %v896, 16
        %v900 = vrot.slane %v898, 7
        %v901 = vshll.u32 %v896, 16
        %v903 = vor.u32 %v900, %v901
        %v906 = vsel %vm364, 0, %v903
        %v907 = vsel %vm364, %v900, 0
        %v909 = vshrl.u32 %v906, 16
        %v911 = vshll.u32 %v906, 16
        %v913 = vrot.slane %v911, 1
        %v914 = vor.u32 %v909, %v913
        %v916 = vshll.u32 %v907, 16
        %v918 = vrot.slane %v916, 1
        %v919 = vsel %vm367, %v914, %v918
        %v923 = vrot.slane %v906, 1
        %v924 = vrot.slane %v907, 1
        %v925 = vsel %vm383, %v923, %v924
        %927 = vmatprep.subr.bf16.mxu0 0
        %928 = vmatpush1.bf16.msra.mxu0 %v488
        %929 = vmatprep.subr.bf16.mxu0 0
        %930 = vmatpush1.bf16.msra.mxu0 %v489
        %931 = vmatprep.subr.bf16.mxu0 0
        %932 = vmatpush1.bf16.msra.mxu0 %v490
        %933 = vmatprep.subr.bf16.mxu0 0
        %934 = vmatpush1.bf16.msra.mxu0 %v491
        %935 = vmatprep.subr.bf16.mxu0 0
        %936 = vmatpush1.bf16.msra.mxu0 %v492
        %937 = vmatprep.subr.bf16.mxu0 0
        %938 = vmatpush1.bf16.msra.mxu0 %v493
        %939 = vmatprep.subr.bf16.mxu0 0
        %940 = vmatpush1.bf16.msra.mxu0 %v494
        %941 = vmatprep.subr.bf16.mxu0 0
        %942 = vmatpush1.bf16.msra.mxu0 %v495
        %943 = vmatprep.subr.bf16.mxu0 0
        %944 = vmatpush1.bf16.msra.mxu0 %v496
        %945 = vmatprep.subr.bf16.mxu0 0
        %946 = vmatpush1.bf16.msra.mxu0 %v497
        %947 = vmatprep.subr.bf16.mxu0 0
        %948 = vmatpush1.bf16.msra.mxu0 %v498
        %949 = vmatprep.subr.bf16.mxu0 0
        %950 = vmatpush1.bf16.msra.mxu0 %v499
        %951 = vmatprep.subr.bf16.mxu0 0
        %952 = vmatpush1.bf16.msra.mxu0 %v500
        %953 = vmatprep.subr.bf16.mxu0 0
        %954 = vmatpush1.bf16.msra.mxu0 %v501
        %955 = vmatprep.subr.bf16.mxu0 0
        %956 = vmatpush1.bf16.msra.mxu0 %v502
        %957 = vmatprep.subr.bf16.mxu0 0
        %958 = vmatpush1.bf16.msra.mxu0 %v503
        %959 = vmatprep.mubr.bf16.mxu0 %v919
        %960 = vmatmul.mubr.bf16.gmra.mrb[0].mxu0 %v906
        %v961 = vpop.f32.mrb[0].mxu0
        %v962 = vadd.f32 %v391, %v961
        %v963 = vpop.f32.mrb[0].mxu0
        %v964 = vpop.f32.mrb[0].mxu0
        %v965 = vadd.f32 %v391, %v964
        %v966 = vpop.f32.mrb[0].mxu0
        %967 = vdwg.mxu0
        %968 = vmatprep.subr.bf16.mxu0 0
        %969 = vmatpush1.bf16.msra.mxu0 %v504
        %970 = vmatprep.subr.bf16.mxu0 0
        %971 = vmatpush1.bf16.msra.mxu0 %v505
        %972 = vmatprep.subr.bf16.mxu0 0
        %973 = vmatpush1.bf16.msra.mxu0 %v506
        %974 = vmatprep.subr.bf16.mxu0 0
        %975 = vmatpush1.bf16.msra.mxu0 %v507
        %976 = vmatprep.subr.bf16.mxu0 0
        %977 = vmatpush1.bf16.msra.mxu0 %v508
        %978 = vmatprep.subr.bf16.mxu0 0
        %979 = vmatpush1.bf16.msra.mxu0 %v509
        %980 = vmatprep.subr.bf16.mxu0 0
        %981 = vmatpush1.bf16.msra.mxu0 %v510
        %982 = vmatprep.subr.bf16.mxu0 0
        %983 = vmatpush1.bf16.msra.mxu0 %v511
        %984 = vmatprep.subr.bf16.mxu0 0
        %985 = vmatpush1.bf16.msra.mxu0 0
        %986 = vmatprep.subr.bf16.mxu0 0
        %987 = vmatpush1.bf16.msra.mxu0 0
        %988 = vmatprep.subr.bf16.mxu0 0
        %989 = vmatpush1.bf16.msra.mxu0 0
        %990 = vmatprep.subr.bf16.mxu0 0
        %991 = vmatpush1.bf16.msra.mxu0 0
        %992 = vmatprep.subr.bf16.mxu0 0
        %993 = vmatpush1.bf16.msra.mxu0 0
        %994 = vmatprep.subr.bf16.mxu0 0
        %995 = vmatpush1.bf16.msra.mxu0 0
        %996 = vmatprep.subr.bf16.mxu0 0
        %997 = vmatpush1.bf16.msra.mxu0 0
        %998 = vmatprep.subr.bf16.mxu0 0
        %999 = vmatpush1.bf16.msra.mxu0 0
        %1000 = vmatprep.mubr.bf16.mxu0 0
        %1001 = vmatmul.mubr.bf16.gmra.mrb[0].mxu0 %v925
        %v1002 = vpop.f32.mrb[0].mxu0
        %v1003 = vadd.f32 %v962, %v1002
        %v1004 = vpop.f32.mrb[0].mxu0
        %v1005 = vpop.f32.mrb[0].mxu0
        %v1006 = vadd.f32 %v965, %v1005
        %v1007 = vpop.f32.mrb[0].mxu0
        %1008 = vdwg.mxu0
        %v1009 = vmax.f32 %v1003, 0.0
        %v1010 = vmax.f32 %v1006, 0.0
        %v1011 = vpack.c.bf16 %v1010, %v1009
        %v1013 = vshrl.u32 %v1011, 16
        %v1015 = vrot.slane %v1013, 7
        %v1016 = vshll.u32 %v1011, 16
        %v1018 = vor.u32 %v1015, %v1016
        %v1021 = vsel %vm364, 0, %v1018
        %v1022 = vsel %vm364, %v1015, 0
        %v1024 = vshrl.u32 %v1021, 16
        %v1026 = vshll.u32 %v1021, 16
        %v1028 = vrot.slane %v1026, 1
        %v1029 = vor.u32 %v1024, %v1028
        %v1031 = vshll.u32 %v1022, 16
        %v1033 = vrot.slane %v1031, 1
        %v1034 = vsel %vm367, %v1029, %v1033
        %v1038 = vrot.slane %v1021, 1
        %v1039 = vrot.slane %v1022, 1
        %v1040 = vsel %vm383, %v1038, %v1039
        %1042 = vmatprep.subr.bf16.mxu0 0
        %1043 = vmatpush1.bf16.msra.mxu0 %v751
        %1044 = vmatprep.subr.bf16.mxu0 0
        %1045 = vmatpush1.bf16.msra.mxu0 %v752
        %1046 = vmatprep.subr.bf16.mxu0 0
        %1047 = vmatpush1.bf16.msra.mxu0 %v753
        %1048 = vmatprep.subr.bf16.mxu0 0
        %1049 = vmatpush1.bf16.msra.mxu0 %v754
        %1050 = vmatprep.subr.bf16.mxu0 0
        %1051 = vmatpush1.bf16.msra.mxu0 %v755
        %1052 = vmatprep.subr.bf16.mxu0 0
        %1053 = vmatpush1.bf16.msra.mxu0 %v756
        %1054 = vmatprep.subr.bf16.mxu0 0
        %1055 = vmatpush1.bf16.msra.mxu0 %v757
        %1056 = vmatprep.subr.bf16.mxu0 0
        %1057 = vmatpush1.bf16.msra.mxu0 %v758
        %1058 = vmatprep.subr.bf16.mxu0 0
        %1059 = vmatpush1.bf16.msra.mxu0 %v759
        %1060 = vmatprep.subr.bf16.mxu0 0
        %1061 = vmatpush1.bf16.msra.mxu0 %v760
        %1062 = vmatprep.subr.bf16.mxu0 0
        %1063 = vmatpush1.bf16.msra.mxu0 %v761
        %1064 = vmatprep.subr.bf16.mxu0 0
        %1065 = vmatpush1.bf16.msra.mxu0 %v762
        %1066 = vmatprep.subr.bf16.mxu0 0
        %1067 = vmatpush1.bf16.msra.mxu0 %v763
        %1068 = vmatprep.subr.bf16.mxu0 0
        %1069 = vmatpush1.bf16.msra.mxu0 %v764
        %1070 = vmatprep.subr.bf16.mxu0 0
        %1071 = vmatpush1.bf16.msra.mxu0 %v765
        %1072 = vmatprep.subr.bf16.mxu0 0
        %1073 = vmatpush1.bf16.msra.mxu0 %v766
        %1074 = vmatprep.mubr.bf16.mxu0 %v1034
        %1075 = vmatmul.mubr.bf16.gmra.mrb[0].mxu0 %v1021
        %v1076 = vpop.f32.mrb[0].mxu0
        %v1077 = vadd.f32 %v654, %v1076
        %v1078 = vpop.f32.mrb[0].mxu0
        %v1079 = vpop.f32.mrb[0].mxu0
        %v1080 = vadd.f32 %v654, %v1079
        %v1081 = vpop.f32.mrb[0].mxu0
        %1082 = vdwg.mxu0
        %1083 = vmatprep.subr.bf16.mxu0 0
        %1084 = vmatpush1.bf16.msra.mxu0 %v767
        %1085 = vmatprep.subr.bf16.mxu0 0
        %1086 = vmatpush1.bf16.msra.mxu0 %v768
        %1087 = vmatprep.subr.bf16.mxu0 0
        %1088 = vmatpush1.bf16.msra.mxu0 %v769
        %1089 = vmatprep.subr.bf16.mxu0 0
        %1090 = vmatpush1.bf16.msra.mxu0 %v770
        %1091 = vmatprep.subr.bf16.mxu0 0
        %1092 = vmatpush1.bf16.msra.mxu0 %v771
        %1093 = vmatprep.subr.bf16.mxu0 0
        %1094 = vmatpush1.bf16.msra.mxu0 %v772
        %1095 = vmatprep.subr.bf16.mxu0 0
        %1096 = vmatpush1.bf16.msra.mxu0 %v773
        %1097 = vmatprep.subr.bf16.mxu0 0
        %1098 = vmatpush1.bf16.msra.mxu0 %v774
        %1099 = vmatprep.subr.bf16.mxu0 0
        %1100 = vmatpush1.bf16.msra.mxu0 0
        %1101 = vmatprep.subr.bf16.mxu0 0
        %1102 = vmatpush1.bf16.msra.mxu0 0
        %1103 = vmatprep.subr.bf16.mxu0 0
        %1104 = vmatpush1.bf16.msra.mxu0 0
        %1105 = vmatprep.subr.bf16.mxu0 0
        %1106 = vmatpush1.bf16.msra.mxu0 0
        %1107 = vmatprep.subr.bf16.mxu0 0
        %1108 = vmatpush1.bf16.msra.mxu0 0
        %1109 = vmatprep.subr.bf16.mxu0 0
        %1110 = vmatpush1.bf16.msra.mxu0 0
        %1111 = vmatprep.subr.bf16.mxu0 0
        %1112 = vmatpush1.bf16.msra.mxu0 0
        %1113 = vmatprep.subr.bf16.mxu0 0
        %1114 = vmatpush1.bf16.msra.mxu0 0
        %1115 = vmatprep.mubr.bf16.mxu0 0
        %1116 = vmatmul.mubr.bf16.gmra.mrb[0].mxu0 %v1040
        %v1117 = vpop.f32.mrb[0].mxu0
        %v1118 = vadd.f32 %v1077, %v1117
        %v1119 = vpop.f32.mrb[0].mxu0
        %v1120 = vpop.f32.mrb[0].mxu0
        %v1121 = vadd.f32 %v1080, %v1120
        %v1122 = vpop.f32.mrb[0].mxu0
        %1123 = vdwg.mxu0
        %v1124 = vunpack.c.l.bf16 %v890
        %v1125 = vunpack.c.l.bf16 %v891
        %v1126 = vadd.f32 %v1118, %v1124
        %v1127 = vadd.f32 %v1121, %v1125
        %v1128 = vmax.f32 %v1126, 0.0
        %v1129 = vmax.f32 %v1127, 0.0
        %s1130 = scalar_lea.vmem %s245, 16 [#allocation8]
        %1131 = vst [vmem:[%s1130] sm:$0xff] %v1128
        %1132 = vst [vmem:[%s1130 + $0x8] sm:$0xff] %v1129
        %s1133 = sand.u32 %s119, 1
        %s1134 = scalar_lea.sflag [#allocation4], %s1133
        %s1135 = sand.u32 %s119, 1
        %s1136 = smul.addr %s1135, 32
        %s1137 = scalar_lea.vmem [#allocation8], %s1136
        // Predicated region
        $region49: #{tpu_custom_call.1} parent=35 // pred_check
          %p1138 = pneg %p129
        $region50: #{tpu_custom_call.1} parent=35 // pred_check_branch
          %1140 = sbr.rel (%p1138) target = $region52
        $region51: #{tpu_custom_call.1} parent=35 // pred_region
          %s1141 = smul.u32 2, %s22
          %s1143 = ssub.s32 512, 512
          %1144 = vsyncadd %s1134, %s1143
          %s1145 = smul.addr %s1141, 2
          %s1146 = smul.addr %s1145, 128
          %s1147 = scalar_lea.hbm %s4, %s1146
          %s1148 = sshll.u32 %s1137, 4
          %s1149 = int_to_ptr.vmem [resolvable:$true] %s1148
          %1154 = dma.vmem_to_hbm [thread:$0]  %s1149, 512, %s1147, %s1134, 128, 128, 8
        $region52: #{tpu_custom_call.1} parent=35 // pred_fallthru
          _
      $region36: #{tpu_custom_call.1} parent=5 // pred_fallthru
        _
      %p1155 = scmp.le.s32.totalorder 2, %s17
      // Predicated region
      $region53: #{tpu_custom_call.1} parent=5 // pred_check
        %p1156 = pneg %p1155
      $region54: #{tpu_custom_call.1} parent=5 // pred_check_branch
        %1158 = sbr.rel (%p1156) target = $region56
      $region55: #{tpu_custom_call.1} parent=5 // pred_region
        %s1159 = ssub.s32 %s17, 2
        // Predicated region
        $region57: #{tpu_custom_call.1} parent=55 // pred_check
          %p1160 = pneg %p135
        $region58: #{tpu_custom_call.1} parent=55 // pred_check_branch
          %1162 = sbr.rel (%p1160) target = $region60
        $region59: #{tpu_custom_call.1} parent=55 // pred_region
          %s1163 = sand.u32 %s120, 1
          %s1164 = scalar_lea.sflag [#allocation4], %s1163
          %s1165 = sand.u32 %s120, 1
          %s1166 = smul.addr %s1165, 32
          %s1167 = scalar_lea.vmem [#allocation8], %s1166
          %1168 = dma.done %s1164, 512
        $region60: #{tpu_custom_call.1} parent=55 // pred_fallthru
          _
      $region56: #{tpu_custom_call.1} parent=5 // pred_fallthru
        _
    $region6: #{tpu_custom_call.1} parent=1 // loop_footer
      %s21 = sadd.s32 1, %s17
    $region7: #{tpu_custom_call.1} parent=1 // loop_footer_branch
      %16 = sbr.rel target = $region3
    $region8: #{tpu_custom_call.1} parent=1 // loop_exit
      _
    %1169 = vsyncpa [#allocation3], 1
    %s1170 = scalar_lea.sflag [#allocation3], 1
    %1171 = vsyncpa %s1170, 1
    %1172 = vsyncpa [#allocation6], 1
    %1173 = vsyncpa [#allocation4], 1
    %s1174 = scalar_lea.sflag [#allocation4], 1
    %1175 = vsyncpa %s1174, 1

</llo_original>
